<compile_context>
chip_gen: v5e
topology: v5e:2x2
jax: 0.10.0
libtpu: 0.0.40
codegen_flags: <defaults>
</compile_context>

<pallas_src>
import math
import jax
import jax.numpy as jnp
from jax.experimental import pallas as pl
from jax.experimental.pallas import tpu as pltpu  # noqa: F401  (CompilerParams when a grid is added)

# ----------------------------- model config ---------------------------------
D_MODEL = 32
NUM_HEADS = 4
HEAD_DIM = D_MODEL // NUM_HEADS
FFN_SIZE = 64
EPS = 1e-6          # module default: eps=1e-06
BATCH = 2
SEQ = 8


# ----------------------------- kernel ----------------------------------------
def _layernorm(x, gamma, beta, eps):
    mu = jnp.mean(x, axis=-1, keepdims=True)
    var = jnp.mean((x - mu) ** 2, axis=-1, keepdims=True)
    return (x - mu) * jax.lax.rsqrt(var + eps) * gamma + beta


def encoder_layer_kernel(x_ref, wqkv_ref, bqkv_ref, wo_ref, w1_ref, b1_ref,
                         w2_ref, vecs_ref, z_ref, y_ref, attn_ref):
    # x_ref: (B,S,D)   wqkv: (D,3D)  bqkv: (1,3D)  wo: (D,D)
    # w1: (D,F)  b1: (1,F)  w2: (F,D)  vecs: (6,D) = [bo, ln1_g, ln1_b, b2, ln2_g, ln2_b]
    B, S, D = x_ref.shape
    H, Dh = NUM_HEADS, HEAD_DIM

    x = x_ref[...].astype(jnp.float32).reshape(B * S, D)          # (BS, D)

    bo    = vecs_ref[0]
    ln1_g = vecs_ref[1]
    ln1_b = vecs_ref[2]
    b2    = vecs_ref[3]
    ln2_g = vecs_ref[4]
    ln2_b = vecs_ref[5]

    # ---- fused QKV projection: one MXU push --------------------------------
    qkv = jnp.dot(x, wqkv_ref[...], preferred_element_type=jnp.float32) + bqkv_ref[0]
    scale = 1.0 / math.sqrt(Dh)
    q = (qkv[:, 0 * D:1 * D] * scale).reshape(B, S, D)            # scale folded into q once
    k = qkv[:, 1 * D:2 * D].reshape(B, S, D)
    v = qkv[:, 2 * D:3 * D].reshape(B, S, D)

    # ---- pack heads into the leading (batch) axis ---------------------------
    # (H*B, S, Dh), head-major order; leading-axis concat of static lane slices
    # is cheap and avoids any sublane<->leading transpose.
    def to_heads(t):
        return jnp.concatenate([t[:, :, h * Dh:(h + 1) * Dh] for h in range(H)], axis=0)

    q3 = to_heads(q)
    k3 = to_heads(k)
    v3 = to_heads(v)

    # ---- batched self attention: 1 scores einsum, 1 softmax, 1 ctx einsum ---
    s = jnp.einsum('bqd,bkd->bqk', q3, k3,
                   preferred_element_type=jnp.float32)             # (H*B, S, S)
    s = s - jnp.max(s, axis=-1, keepdims=True)
    e = jnp.exp(s)
    p = e / jnp.sum(e, axis=-1, keepdims=True)                     # exact softmax (torch parity)

    # attention probabilities out: (B, H, S, S)
    p_hbst = p.reshape(H, B, S, S)                                 # leading-dim split only
    for b in range(B):
        attn_ref[b] = p_hbst[:, b].astype(attn_ref.dtype)

    ctx = jnp.einsum('bqk,bkd->bqd', p, v3,
                     preferred_element_type=jnp.float32)           # (H*B, S, Dh)
    ctx = jnp.concatenate([ctx[h * B:(h + 1) * B] for h in range(H)], axis=-1)  # (B, S, D)
    ctx = ctx.reshape(B * S, D)

    # ---- single output projection -------------------------------------------
    o = jnp.dot(ctx, wo_ref[...], preferred_element_type=jnp.float32) + bo      # (BS, D)

    # ---- residual + post-LayerNorm 1 ----------------------------------------
    y = _layernorm(x + o, ln1_g, ln1_b, EPS)
    y_ref[...] = y.reshape(B, S, D).astype(y_ref.dtype)

    # ---- FFN + residual + post-LayerNorm 2 ----------------------------------
    h1 = jnp.dot(y, w1_ref[...], preferred_element_type=jnp.float32) + b1_ref[0]
    h1 = jnp.maximum(h1, 0.0)                                      # relu
    f = jnp.dot(h1, w2_ref[...], preferred_element_type=jnp.float32) + b2
    z = _layernorm(y + f, ln2_g, ln2_b, EPS)
    z_ref[...] = z.reshape(B, S, D).astype(z_ref.dtype)


# ----------------------------- parameter packing (one-time) -------------------
def pack_params(p):
    """Pack raw per-matrix params ONCE (at load time), outside the per-call path."""
    return {
        'wqkv': jnp.concatenate([p['wq'], p['wk'], p['wv']], axis=1),            # (D, 3D)
        'bqkv': jnp.concatenate([p['bq'], p['bk'], p['bv']], axis=1),            # (1, 3D)
        'wo': p['wo'],
        'w1': p['w1'],
        'b1': p['b1'],
        'w2': p['w2'],
        'vecs': jnp.concatenate([p['bo'], p['ln1_g'], p['ln1_b'],
                                 p['b2'], p['ln2_g'], p['ln2_b']], axis=0),       # (6, D)
    }


# ----------------------------- wrapper ----------------------------------------
def _forward(x, pk):
    """Mirrors TransformerEncoderLayer.forward: returns (x_out, sa_res)."""
    # TODO(synk): mask / pos_emb support not implemented.
    B, S, D = x.shape
    z, y, attn = pl.pallas_call(
        encoder_layer_kernel,
        out_shape=(jax.ShapeDtypeStruct((B, S, D), x.dtype),                 # z (final)
                   jax.ShapeDtypeStruct((B, S, D), x.dtype),                 # y (attn block out)
                   jax.ShapeDtypeStruct((B, NUM_HEADS, S, S), jnp.float32)), # attention probs
    )(x, pk['wqkv'], pk['bqkv'], pk['wo'], pk['w1'], pk['b1'], pk['w2'], pk['vecs'])
    return z, {'x': y, 'attn': attn}


transformer_encoder_layer = jax.jit(_forward)


# ----------------------------- param init ------------------------------------
def init_params(key):
    ks = jax.random.split(key, 8)
    s = 0.02
    return {
        'wq': s * jax.random.normal(ks[0], (D_MODEL, D_MODEL), jnp.float32),
        'wk': s * jax.random.normal(ks[1], (D_MODEL, D_MODEL), jnp.float32),
        'wv': s * jax.random.normal(ks[2], (D_MODEL, D_MODEL), jnp.float32),
        'wo': s * jax.random.normal(ks[3], (D_MODEL, D_MODEL), jnp.float32),
        'bq': jnp.zeros((1, D_MODEL), jnp.float32),
        'bk': jnp.zeros((1, D_MODEL), jnp.float32),
        'bv': jnp.zeros((1, D_MODEL), jnp.float32),
        'bo': jnp.zeros((1, D_MODEL), jnp.float32),
        'ln1_g': jnp.ones((1, D_MODEL), jnp.float32),
        'ln1_b': jnp.zeros((1, D_MODEL), jnp.float32),
        'w1': s * jax.random.normal(ks[4], (D_MODEL, FFN_SIZE), jnp.float32),
        'b1': jnp.zeros((1, FFN_SIZE), jnp.float32),
        'w2': s * jax.random.normal(ks[5], (FFN_SIZE, D_MODEL), jnp.float32),
        'b2': jnp.zeros((1, D_MODEL), jnp.float32),
        'ln2_g': jnp.ones((1, D_MODEL), jnp.float32),
        'ln2_b': jnp.zeros((1, D_MODEL), jnp.float32),
    }


# ----------------------------- main -------------------------------------------
if __name__ == "__main__":
    key = jax.random.PRNGKey(0)
    pkey, xkey = jax.random.split(key)
    params = init_params(pkey)
    packed = pack_params(params)                      # packed once, outside the hot path
    x = jax.random.normal(xkey, (BATCH, SEQ, D_MODEL), jnp.float32)

    y, sa_res = transformer_encoder_layer(x, packed)
    jax.block_until_ready(y)
    jax.block_until_ready(sa_res['x'])
    jax.block_until_ready(sa_res['attn'])

    assert y.shape == (BATCH, SEQ, D_MODEL)
    assert sa_res['x'].shape == (BATCH, SEQ, D_MODEL)
    assert sa_res['attn'].shape == (BATCH, NUM_HEADS, SEQ, SEQ)
    print("KERNEL_OK")
</pallas_src>

<mosaic_0001>
module attributes {stable_mosaic.version = 11 : i64} {
  func.func @encoder_layer_kernel(%arg0: memref<2x8x32xf32, #tpu.memory_space<vmem>>, %arg1: memref<32x96xf32, #tpu.memory_space<vmem>>, %arg2: memref<1x96xf32, #tpu.memory_space<vmem>>, %arg3: memref<32x32xf32, #tpu.memory_space<vmem>>, %arg4: memref<32x64xf32, #tpu.memory_space<vmem>>, %arg5: memref<1x64xf32, #tpu.memory_space<vmem>>, %arg6: memref<64x32xf32, #tpu.memory_space<vmem>>, %arg7: memref<6x32xf32, #tpu.memory_space<vmem>>, %arg8: memref<2x8x32xf32, #tpu.memory_space<vmem>>, %arg9: memref<2x8x32xf32, #tpu.memory_space<vmem>>, %arg10: memref<2x4x8x8xf32, #tpu.memory_space<vmem>>) attributes {dimension_semantics = [], scalar_prefetch = 0 : i64, scratch_operands = 0 : i64, tpu.core_type = #tpu.core_type<tc>} {
    %c0 = arith.constant 0 : index
    %c0_0 = arith.constant 0 : index
    %c0_1 = arith.constant 0 : index
    %0 = vector.load %arg0[%c0, %c0_0, %c0_1] : memref<2x8x32xf32, #tpu.memory_space<vmem>>, vector<2x8x32xf32>
    %1 = vector.shape_cast %0 : vector<2x8x32xf32> to vector<16x32xf32>
    %c0_2 = arith.constant 0 : index
    %c0_3 = arith.constant 0 : index
    %2 = vector.load %arg7[%c0_2, %c0_3] : memref<6x32xf32, #tpu.memory_space<vmem>>, vector<1x32xf32>
    %3 = vector.shape_cast %2 : vector<1x32xf32> to vector<32xf32>
    %c1 = arith.constant 1 : index
    %c0_4 = arith.constant 0 : index
    %4 = vector.load %arg7[%c1, %c0_4] : memref<6x32xf32, #tpu.memory_space<vmem>>, vector<1x32xf32>
    %5 = vector.shape_cast %4 : vector<1x32xf32> to vector<32xf32>
    %c2 = arith.constant 2 : index
    %c0_5 = arith.constant 0 : index
    %6 = vector.load %arg7[%c2, %c0_5] : memref<6x32xf32, #tpu.memory_space<vmem>>, vector<1x32xf32>
    %7 = vector.shape_cast %6 : vector<1x32xf32> to vector<32xf32>
    %c3 = arith.constant 3 : index
    %c0_6 = arith.constant 0 : index
    %8 = vector.load %arg7[%c3, %c0_6] : memref<6x32xf32, #tpu.memory_space<vmem>>, vector<1x32xf32>
    %9 = vector.shape_cast %8 : vector<1x32xf32> to vector<32xf32>
    %c4 = arith.constant 4 : index
    %c0_7 = arith.constant 0 : index
    %10 = vector.load %arg7[%c4, %c0_7] : memref<6x32xf32, #tpu.memory_space<vmem>>, vector<1x32xf32>
    %11 = vector.shape_cast %10 : vector<1x32xf32> to vector<32xf32>
    %c5 = arith.constant 5 : index
    %c0_8 = arith.constant 0 : index
    %12 = vector.load %arg7[%c5, %c0_8] : memref<6x32xf32, #tpu.memory_space<vmem>>, vector<1x32xf32>
    %13 = vector.shape_cast %12 : vector<1x32xf32> to vector<32xf32>
    %c0_9 = arith.constant 0 : index
    %c0_10 = arith.constant 0 : index
    %14 = vector.load %arg1[%c0_9, %c0_10] : memref<32x96xf32, #tpu.memory_space<vmem>>, vector<32x96xf32>
    %cst = arith.constant dense<0.000000e+00> : vector<16x96xf32>
    %15 = tpu.matmul %1, %14, %cst {dimension_numbers = #tpu.dot_dimension_numbers<[1], [0], [0], [1], [0, 0, 1, 1], [], []>} : vector<16x32xf32>, vector<32x96xf32>, vector<16x96xf32> -> vector<16x96xf32>
    %c0_11 = arith.constant 0 : index
    %c0_12 = arith.constant 0 : index
    %16 = vector.load %arg2[%c0_11, %c0_12] : memref<1x96xf32, #tpu.memory_space<vmem>>, vector<1x96xf32>
    %17 = vector.shape_cast %16 : vector<1x96xf32> to vector<96xf32>
    %18 = vector.shape_cast %17 : vector<96xf32> to vector<1x96xf32>
    %19 = vector.broadcast %18 : vector<1x96xf32> to vector<16x96xf32>
    %20 = arith.addf %15, %19 : vector<16x96xf32>
    %21 = vector.extract_strided_slice %20 {offsets = [0, 0], sizes = [16, 32], strides = [1, 1]} : vector<16x96xf32> to vector<16x32xf32>
    %cst_13 = arith.constant 0.353553385 : f32
    %22 = vector.broadcast %cst_13 : f32 to vector<16x32xf32>
    %23 = arith.mulf %21, %22 : vector<16x32xf32>
    %24 = vector.shape_cast %23 : vector<16x32xf32> to vector<2x8x32xf32>
    %25 = vector.extract_strided_slice %20 {offsets = [0, 32], sizes = [16, 32], strides = [1, 1]} : vector<16x96xf32> to vector<16x32xf32>
    %26 = vector.shape_cast %25 : vector<16x32xf32> to vector<2x8x32xf32>
    %27 = vector.extract_strided_slice %20 {offsets = [0, 64], sizes = [16, 32], strides = [1, 1]} : vector<16x96xf32> to vector<16x32xf32>
    %28 = vector.shape_cast %27 : vector<16x32xf32> to vector<2x8x32xf32>
    %29 = vector.extract_strided_slice %24 {offsets = [0, 0, 0], sizes = [2, 8, 8], strides = [1, 1, 1]} : vector<2x8x32xf32> to vector<2x8x8xf32>
    %30 = vector.extract_strided_slice %24 {offsets = [0, 0, 8], sizes = [2, 8, 8], strides = [1, 1, 1]} : vector<2x8x32xf32> to vector<2x8x8xf32>
    %31 = vector.extract_strided_slice %24 {offsets = [0, 0, 16], sizes = [2, 8, 8], strides = [1, 1, 1]} : vector<2x8x32xf32> to vector<2x8x8xf32>
    %32 = vector.extract_strided_slice %24 {offsets = [0, 0, 24], sizes = [2, 8, 8], strides = [1, 1, 1]} : vector<2x8x32xf32> to vector<2x8x8xf32>
    %33 = tpu.concatenate %29, %30, %31, %32 in 0 : vector<2x8x8xf32>, vector<2x8x8xf32>, vector<2x8x8xf32>, vector<2x8x8xf32> -> vector<8x8x8xf32>
    %34 = vector.extract_strided_slice %26 {offsets = [0, 0, 0], sizes = [2, 8, 8], strides = [1, 1, 1]} : vector<2x8x32xf32> to vector<2x8x8xf32>
    %35 = vector.extract_strided_slice %26 {offsets = [0, 0, 8], sizes = [2, 8, 8], strides = [1, 1, 1]} : vector<2x8x32xf32> to vector<2x8x8xf32>
    %36 = vector.extract_strided_slice %26 {offsets = [0, 0, 16], sizes = [2, 8, 8], strides = [1, 1, 1]} : vector<2x8x32xf32> to vector<2x8x8xf32>
    %37 = vector.extract_strided_slice %26 {offsets = [0, 0, 24], sizes = [2, 8, 8], strides = [1, 1, 1]} : vector<2x8x32xf32> to vector<2x8x8xf32>
    %38 = tpu.concatenate %34, %35, %36, %37 in 0 : vector<2x8x8xf32>, vector<2x8x8xf32>, vector<2x8x8xf32>, vector<2x8x8xf32> -> vector<8x8x8xf32>
    %39 = vector.extract_strided_slice %28 {offsets = [0, 0, 0], sizes = [2, 8, 8], strides = [1, 1, 1]} : vector<2x8x32xf32> to vector<2x8x8xf32>
    %40 = vector.extract_strided_slice %28 {offsets = [0, 0, 8], sizes = [2, 8, 8], strides = [1, 1, 1]} : vector<2x8x32xf32> to vector<2x8x8xf32>
    %41 = vector.extract_strided_slice %28 {offsets = [0, 0, 16], sizes = [2, 8, 8], strides = [1, 1, 1]} : vector<2x8x32xf32> to vector<2x8x8xf32>
    %42 = vector.extract_strided_slice %28 {offsets = [0, 0, 24], sizes = [2, 8, 8], strides = [1, 1, 1]} : vector<2x8x32xf32> to vector<2x8x8xf32>
    %43 = tpu.concatenate %39, %40, %41, %42 in 0 : vector<2x8x8xf32>, vector<2x8x8xf32>, vector<2x8x8xf32>, vector<2x8x8xf32> -> vector<8x8x8xf32>
    "tpu.trace_start"() <{level = 10 : i32, message = "bqd,bkd->bqk"}> : () -> ()
    %cst_14 = arith.constant dense<0.000000e+00> : vector<8x8x8xf32>
    %44 = tpu.matmul %33, %38, %cst_14 {dimension_numbers = #tpu.dot_dimension_numbers<[2], [2], [1], [1], [0, 0, 0, 1, 1, 1], [0], [0]>} : vector<8x8x8xf32>, vector<8x8x8xf32>, vector<8x8x8xf32> -> vector<8x8x8xf32>
    "tpu.trace_stop"() : () -> ()
    %cst_15 = arith.constant dense<0xFF800000> : vector<8x8xf32>
    %45 = vector.multi_reduction <maximumf>, %44, %cst_15 [2] : vector<8x8x8xf32> to vector<8x8xf32>
    %46 = vector.shape_cast %45 : vector<8x8xf32> to vector<8x8x1xf32>
    %47 = vector.broadcast %46 : vector<8x8x1xf32> to vector<8x8x8xf32>
    %48 = arith.subf %44, %47 : vector<8x8x8xf32>
    %49 = math.exp %48 : vector<8x8x8xf32>
    %cst_16 = arith.constant dense<0.000000e+00> : vector<8x8xf32>
    %50 = vector.multi_reduction <add>, %49, %cst_16 [2] : vector<8x8x8xf32> to vector<8x8xf32>
    %51 = vector.shape_cast %50 : vector<8x8xf32> to vector<8x8x1xf32>
    %52 = vector.broadcast %51 : vector<8x8x1xf32> to vector<8x8x8xf32>
    %53 = arith.divf %49, %52 : vector<8x8x8xf32>
    %54 = vector.shape_cast %53 : vector<8x8x8xf32> to vector<4x2x8x8xf32>
    %55 = vector.extract_strided_slice %54 {offsets = [0, 0, 0, 0], sizes = [4, 1, 8, 8], strides = [1, 1, 1, 1]} : vector<4x2x8x8xf32> to vector<4x1x8x8xf32>
    %56 = vector.shape_cast %55 : vector<4x1x8x8xf32> to vector<4x8x8xf32>
    %c0_17 = arith.constant 0 : index
    %c0_18 = arith.constant 0 : index
    %c0_19 = arith.constant 0 : index
    %c0_20 = arith.constant 0 : index
    %57 = vector.load %arg10[%c0_17, %c0_18, %c0_19, %c0_20] : memref<2x4x8x8xf32, #tpu.memory_space<vmem>>, vector<1x4x8x8xf32>
    %58 = vector.shape_cast %57 : vector<1x4x8x8xf32> to vector<4x8x8xf32>
    %59 = vector.shape_cast %56 : vector<4x8x8xf32> to vector<1x4x8x8xf32>
    tpu.vector_store %arg10[%c0_17, %c0_18, %c0_19, %c0_20], %59 {strides = array<i32>} : memref<2x4x8x8xf32, #tpu.memory_space<vmem>>, vector<1x4x8x8xf32>,
    %60 = vector.extract_strided_slice %54 {offsets = [0, 1, 0, 0], sizes = [4, 1, 8, 8], strides = [1, 1, 1, 1]} : vector<4x2x8x8xf32> to vector<4x1x8x8xf32>
    %61 = vector.shape_cast %60 : vector<4x1x8x8xf32> to vector<4x8x8xf32>
    %c1_21 = arith.constant 1 : index
    %c0_22 = arith.constant 0 : index
    %c0_23 = arith.constant 0 : index
    %c0_24 = arith.constant 0 : index
    %62 = vector.load %arg10[%c1_21, %c0_22, %c0_23, %c0_24] : memref<2x4x8x8xf32, #tpu.memory_space<vmem>>, vector<1x4x8x8xf32>
    %63 = vector.shape_cast %62 : vector<1x4x8x8xf32> to vector<4x8x8xf32>
    %64 = vector.shape_cast %61 : vector<4x8x8xf32> to vector<1x4x8x8xf32>
    tpu.vector_store %arg10[%c1_21, %c0_22, %c0_23, %c0_24], %64 {strides = array<i32>} : memref<2x4x8x8xf32, #tpu.memory_space<vmem>>, vector<1x4x8x8xf32>,
    "tpu.trace_start"() <{level = 10 : i32, message = "bqk,bkd->bqd"}> : () -> ()
    %cst_25 = arith.constant dense<0.000000e+00> : vector<8x8x8xf32>
    %65 = tpu.matmul %53, %43, %cst_25 {dimension_numbers = #tpu.dot_dimension_numbers<[2], [1], [1], [2], [0, 0, 0, 1, 1, 2], [0], [0]>} : vector<8x8x8xf32>, vector<8x8x8xf32>, vector<8x8x8xf32> -> vector<8x8x8xf32>
    "tpu.trace_stop"() : () -> ()
    %66 = vector.extract_strided_slice %65 {offsets = [0, 0, 0], sizes = [2, 8, 8], strides = [1, 1, 1]} : vector<8x8x8xf32> to vector<2x8x8xf32>
    %67 = vector.extract_strided_slice %65 {offsets = [2, 0, 0], sizes = [2, 8, 8], strides = [1, 1, 1]} : vector<8x8x8xf32> to vector<2x8x8xf32>
    %68 = vector.extract_strided_slice %65 {offsets = [4, 0, 0], sizes = [2, 8, 8], strides = [1, 1, 1]} : vector<8x8x8xf32> to vector<2x8x8xf32>
    %69 = vector.extract_strided_slice %65 {offsets = [6, 0, 0], sizes = [2, 8, 8], strides = [1, 1, 1]} : vector<8x8x8xf32> to vector<2x8x8xf32>
    %70 = tpu.concatenate %66, %67, %68, %69 in 2 : vector<2x8x8xf32>, vector<2x8x8xf32>, vector<2x8x8xf32>, vector<2x8x8xf32> -> vector<2x8x32xf32>
    %71 = vector.shape_cast %70 : vector<2x8x32xf32> to vector<16x32xf32>
    %c0_26 = arith.constant 0 : index
    %c0_27 = arith.constant 0 : index
    %72 = vector.load %arg3[%c0_26, %c0_27] : memref<32x32xf32, #tpu.memory_space<vmem>>, vector<32x32xf32>
    %cst_28 = arith.constant dense<0.000000e+00> : vector<16x32xf32>
    %73 = tpu.matmul %71, %72, %cst_28 {dimension_numbers = #tpu.dot_dimension_numbers<[1], [0], [0], [1], [0, 0, 1, 1], [], []>} : vector<16x32xf32>, vector<32x32xf32>, vector<16x32xf32> -> vector<16x32xf32>
    %74 = vector.shape_cast %3 : vector<32xf32> to vector<1x32xf32>
    %75 = vector.broadcast %74 : vector<1x32xf32> to vector<16x32xf32>
    %76 = arith.addf %73, %75 : vector<16x32xf32>
    %77 = arith.addf %1, %76 : vector<16x32xf32>
    %cst_29 = arith.constant dense<0.000000e+00> : vector<16xf32>
    %78 = vector.multi_reduction <add>, %77, %cst_29 [1] : vector<16x32xf32> to vector<16xf32>
    %79 = vector.shape_cast %78 : vector<16xf32> to vector<16x1xf32>
    %cst_30 = arith.constant 3.200000e+01 : f32
    %80 = vector.broadcast %cst_30 : f32 to vector<16x1xf32>
    %81 = arith.divf %79, %80 : vector<16x1xf32>
    %82 = vector.broadcast %81 : vector<16x1xf32> to vector<16x32xf32>
    %83 = arith.subf %77, %82 : vector<16x32xf32>
    %84 = arith.mulf %83, %83 : vector<16x32xf32>
    %cst_31 = arith.constant dense<0.000000e+00> : vector<16xf32>
    %85 = vector.multi_reduction <add>, %84, %cst_31 [1] : vector<16x32xf32> to vector<16xf32>
    %86 = vector.shape_cast %85 : vector<16xf32> to vector<16x1xf32>
    %cst_32 = arith.constant 3.200000e+01 : f32
    %87 = vector.broadcast %cst_32 : f32 to vector<16x1xf32>
    %88 = arith.divf %86, %87 : vector<16x1xf32>
    %89 = vector.broadcast %81 : vector<16x1xf32> to vector<16x32xf32>
    %90 = arith.subf %77, %89 : vector<16x32xf32>
    %cst_33 = arith.constant 9.99999997E-7 : f32
    %91 = vector.broadcast %cst_33 : f32 to vector<16x1xf32>
    %92 = arith.addf %88, %91 : vector<16x1xf32>
    %93 = math.rsqrt %92 : vector<16x1xf32>
    %94 = vector.broadcast %93 : vector<16x1xf32> to vector<16x32xf32>
    %95 = arith.mulf %90, %94 : vector<16x32xf32>
    %96 = vector.shape_cast %5 : vector<32xf32> to vector<1x32xf32>
    %97 = vector.broadcast %96 : vector<1x32xf32> to vector<16x32xf32>
    %98 = arith.mulf %95, %97 : vector<16x32xf32>
    %99 = vector.shape_cast %7 : vector<32xf32> to vector<1x32xf32>
    %100 = vector.broadcast %99 : vector<1x32xf32> to vector<16x32xf32>
    %101 = arith.addf %98, %100 : vector<16x32xf32>
    %102 = vector.shape_cast %101 : vector<16x32xf32> to vector<2x8x32xf32>
    %c0_34 = arith.constant 0 : index
    %c0_35 = arith.constant 0 : index
    %c0_36 = arith.constant 0 : index
    %103 = vector.load %arg9[%c0_34, %c0_35, %c0_36] : memref<2x8x32xf32, #tpu.memory_space<vmem>>, vector<2x8x32xf32>
    tpu.vector_store %arg9[%c0_34, %c0_35, %c0_36], %102 {strides = array<i32>} : memref<2x8x32xf32, #tpu.memory_space<vmem>>, vector<2x8x32xf32>,
    %c0_37 = arith.constant 0 : index
    %c0_38 = arith.constant 0 : index
    %104 = vector.load %arg4[%c0_37, %c0_38] : memref<32x64xf32, #tpu.memory_space<vmem>>, vector<32x64xf32>
    %cst_39 = arith.constant dense<0.000000e+00> : vector<16x64xf32>
    %105 = tpu.matmul %101, %104, %cst_39 {dimension_numbers = #tpu.dot_dimension_numbers<[1], [0], [0], [1], [0, 0, 1, 1], [], []>} : vector<16x32xf32>, vector<32x64xf32>, vector<16x64xf32> -> vector<16x64xf32>
    %c0_40 = arith.constant 0 : index
    %c0_41 = arith.constant 0 : index
    %106 = vector.load %arg5[%c0_40, %c0_41] : memref<1x64xf32, #tpu.memory_space<vmem>>, vector<1x64xf32>
    %107 = vector.shape_cast %106 : vector<1x64xf32> to vector<64xf32>
    %108 = vector.shape_cast %107 : vector<64xf32> to vector<1x64xf32>
    %109 = vector.broadcast %108 : vector<1x64xf32> to vector<16x64xf32>
    %110 = arith.addf %105, %109 : vector<16x64xf32>
    %cst_42 = arith.constant 0.000000e+00 : f32
    %111 = vector.broadcast %cst_42 : f32 to vector<16x64xf32>
    %112 = arith.maximumf %110, %111 : vector<16x64xf32>
    %c0_43 = arith.constant 0 : index
    %c0_44 = arith.constant 0 : index
    %113 = vector.load %arg6[%c0_43, %c0_44] : memref<64x32xf32, #tpu.memory_space<vmem>>, vector<64x32xf32>
    %cst_45 = arith.constant dense<0.000000e+00> : vector<16x32xf32>
    %114 = tpu.matmul %112, %113, %cst_45 {dimension_numbers = #tpu.dot_dimension_numbers<[1], [0], [0], [1], [0, 0, 1, 1], [], []>} : vector<16x64xf32>, vector<64x32xf32>, vector<16x32xf32> -> vector<16x32xf32>
    %115 = vector.shape_cast %9 : vector<32xf32> to vector<1x32xf32>
    %116 = vector.broadcast %115 : vector<1x32xf32> to vector<16x32xf32>
    %117 = arith.addf %114, %116 : vector<16x32xf32>
    %118 = arith.addf %101, %117 : vector<16x32xf32>
    %cst_46 = arith.constant dense<0.000000e+00> : vector<16xf32>
    %119 = vector.multi_reduction <add>, %118, %cst_46 [1] : vector<16x32xf32> to vector<16xf32>
    %120 = vector.shape_cast %119 : vector<16xf32> to vector<16x1xf32>
    %cst_47 = arith.constant 3.200000e+01 : f32
    %121 = vector.broadcast %cst_47 : f32 to vector<16x1xf32>
    %122 = arith.divf %120, %121 : vector<16x1xf32>
    %123 = vector.broadcast %122 : vector<16x1xf32> to vector<16x32xf32>
    %124 = arith.subf %118, %123 : vector<16x32xf32>
    %125 = arith.mulf %124, %124 : vector<16x32xf32>
    %cst_48 = arith.constant dense<0.000000e+00> : vector<16xf32>
    %126 = vector.multi_reduction <add>, %125, %cst_48 [1] : vector<16x32xf32> to vector<16xf32>
    %127 = vector.shape_cast %126 : vector<16xf32> to vector<16x1xf32>
    %cst_49 = arith.constant 3.200000e+01 : f32
    %128 = vector.broadcast %cst_49 : f32 to vector<16x1xf32>
    %129 = arith.divf %127, %128 : vector<16x1xf32>
    %130 = vector.broadcast %122 : vector<16x1xf32> to vector<16x32xf32>
    %131 = arith.subf %118, %130 : vector<16x32xf32>
    %cst_50 = arith.constant 9.99999997E-7 : f32
    %132 = vector.broadcast %cst_50 : f32 to vector<16x1xf32>
    %133 = arith.addf %129, %132 : vector<16x1xf32>
    %134 = math.rsqrt %133 : vector<16x1xf32>
    %135 = vector.broadcast %134 : vector<16x1xf32> to vector<16x32xf32>
    %136 = arith.mulf %131, %135 : vector<16x32xf32>
    %137 = vector.shape_cast %11 : vector<32xf32> to vector<1x32xf32>
    %138 = vector.broadcast %137 : vector<1x32xf32> to vector<16x32xf32>
    %139 = arith.mulf %136, %138 : vector<16x32xf32>
    %140 = vector.shape_cast %13 : vector<32xf32> to vector<1x32xf32>
    %141 = vector.broadcast %140 : vector<1x32xf32> to vector<16x32xf32>
    %142 = arith.addf %139, %141 : vector<16x32xf32>
    %143 = vector.shape_cast %142 : vector<16x32xf32> to vector<2x8x32xf32>
    %c0_51 = arith.constant 0 : index
    %c0_52 = arith.constant 0 : index
    %c0_53 = arith.constant 0 : index
    %144 = vector.load %arg8[%c0_51, %c0_52, %c0_53] : memref<2x8x32xf32, #tpu.memory_space<vmem>>, vector<2x8x32xf32>
    tpu.vector_store %arg8[%c0_51, %c0_52, %c0_53], %143 {strides = array<i32>} : memref<2x8x32xf32, #tpu.memory_space<vmem>>, vector<2x8x32xf32>,
    return
  }
}

</mosaic_0001>

<llo_original>
// kernel: _forward.1
$region0: #{_forward.1}
  #allocation0 [shape = 'u32[]', space=smem, size = 0x4, offset = 0x4, fixed_abs, tag = 'smem constant byte address 0x4 - core index']
  #allocation1 [shape = 'u32[72,128]{1,0:T(1,128)}', space=vmem, size = 0x9000, scoped, tag = 'internal scratch']
  %s0 = inlined_call_operand.hbm [shape: f32[2,8,32], index: 0, kind: input, shape index: {}]
  %s1 = inlined_call_operand.vmem [shape: f32[32,96], index: 1, kind: input, shape index: {}]
  %s2 = inlined_call_operand.vmem [shape: f32[1,96], index: 2, kind: input, shape index: {}]
  %s3 = inlined_call_operand.vmem [shape: f32[32,32], index: 3, kind: input, shape index: {}]
  %s4 = inlined_call_operand.vmem [shape: f32[32,64], index: 4, kind: input, shape index: {}]
  %s5 = inlined_call_operand.hbm [shape: f32[1,64], index: 5, kind: input, shape index: {}]
  %s6 = inlined_call_operand.vmem [shape: f32[64,32], index: 6, kind: input, shape index: {}]
  %s7 = inlined_call_operand.hbm [shape: f32[6,32], index: 7, kind: input, shape index: {}]
  %s8 = inlined_call_operand.hbm [shape: f32[2,8,32], index: 8, kind: output, shape index: {0}]
  %s9 = inlined_call_operand.hbm [shape: f32[2,8,32], index: 9, kind: output, shape index: {1}]
  %s10 = inlined_call_operand.hbm [shape: f32[2,4,8,8], index: 10, kind: output, shape index: {2}]
  %11 = xla_tuple %s8, %s9, %s10
  %s12 = sld [smem:[#allocation0]]
  $region70: #{_forward.1} parent=0
    _
  %s14 = ssub.s32 1, %s12
  %s15 = scalar_select 0, %s14, %s12
  $region1: #{_forward.1} parent=0
    #allocation2 [shape = 'u8[8192]{0}', space=vmem, size = 0x2000, scoped, tag = 'input window, operand 0, single buffered']
    #allocation3 [shape = 's32[1]{0}', space=sflag, size = 0x4, scoped, tag = 'scoped memory for _forward.1']
    #allocation4 [shape = 's32[1]{0}', space=sflag, size = 0x4, scoped, tag = 'scoped memory for _forward.1']
    #allocation5 [shape = 'u8[512]{0}', space=vmem, size = 0x400, scoped, tag = 'input window, operand 5, single buffered']
    #allocation6 [shape = 's32[1]{0}', space=sflag, size = 0x4, scoped, tag = 'scoped memory for _forward.1']
    #allocation7 [shape = 'u8[4096]{0}', space=vmem, size = 0x1000, scoped, tag = 'input window, operand 7, single buffered']
    #allocation8 [shape = 'u8[8192]{0}', space=vmem, size = 0x2000, scoped, tag = 'output window, operand 0, single buffered']
    #allocation9 [shape = 'u8[8192]{0}', space=vmem, size = 0x2000, scoped, tag = 'output window, operand 1, single buffered']
    #allocation10 [shape = 's32[1]{0}', space=sflag, size = 0x4, scoped, tag = 'scoped memory for _forward.1']
    #allocation11 [shape = 'u8[32768]{0}', space=vmem, size = 0x8000, scoped, tag = 'output window, operand 2, single buffered']
    %16 = vsyncpa [#allocation3], 0
    %17 = vsyncpa [#allocation6], 0
    %18 = vsyncpa [#allocation4], 0
    %19 = vsyncpa [#allocation10], 0
    // Predicated region
    $region2: #{_forward.1} parent=1 // pred_check
      _
    $region3: #{_forward.1} parent=1 // pred_check_branch
      %21 = sbr.rel (0) target = $region5
    $region4: #{_forward.1} parent=1 // pred_region
      %23 = vsyncadd [#allocation3], 0
      %s24 = sshll.u32 %s0, 4
      %s25 = int_to_ptr.hbm [resolvable:$true] %s24
      %s26 = sshll.u32 [#allocation2], 4
      %s27 = int_to_ptr.vmem [resolvable:$true] %s26
      %32 = dma.hbm_to_vmem [thread:$0]  %s25, 256, %s27, [#allocation3], 128, 128, 8
    $region5: #{_forward.1} parent=1 // pred_fallthru
      _
    // Predicated region
    $region6: #{_forward.1} parent=1 // pred_check
      _
    $region7: #{_forward.1} parent=1 // pred_check_branch
      %34 = sbr.rel (0) target = $region9
    $region8: #{_forward.1} parent=1 // pred_region
      _
    $region9: #{_forward.1} parent=1 // pred_fallthru
      _
    // Predicated region
    $region10: #{_forward.1} parent=1 // pred_check
      _
    $region11: #{_forward.1} parent=1 // pred_check_branch
      %36 = sbr.rel (0) target = $region13
    $region12: #{_forward.1} parent=1 // pred_region
      _
    $region13: #{_forward.1} parent=1 // pred_fallthru
      _
    // Predicated region
    $region14: #{_forward.1} parent=1 // pred_check
      _
    $region15: #{_forward.1} parent=1 // pred_check_branch
      %38 = sbr.rel (0) target = $region17
    $region16: #{_forward.1} parent=1 // pred_region
      _
    $region17: #{_forward.1} parent=1 // pred_fallthru
      _
    // Predicated region
    $region18: #{_forward.1} parent=1 // pred_check
      _
    $region19: #{_forward.1} parent=1 // pred_check_branch
      %40 = sbr.rel (0) target = $region21
    $region20: #{_forward.1} parent=1 // pred_region
      _
    $region21: #{_forward.1} parent=1 // pred_fallthru
      _
    // Predicated region
    $region22: #{_forward.1} parent=1 // pred_check
      _
    $region23: #{_forward.1} parent=1 // pred_check_branch
      %42 = sbr.rel (0) target = $region25
    $region24: #{_forward.1} parent=1 // pred_region
      %44 = vsyncadd [#allocation6], 0
      %s46 = sshll.u32 %s5, 4
      %s47 = int_to_ptr.hbm [resolvable:$true] %s46
      %s48 = sshll.u32 [#allocation5], 4
      %s49 = int_to_ptr.vmem [resolvable:$true] %s48
      %51 = dma.hbm_to_vmem [thread:$0]  %s47, 16, %s49, [#allocation6]
    $region25: #{_forward.1} parent=1 // pred_fallthru
      _
    // Predicated region
    $region26: #{_forward.1} parent=1 // pred_check
      _
    $region27: #{_forward.1} parent=1 // pred_check_branch
      %53 = sbr.rel (0) target = $region29
    $region28: #{_forward.1} parent=1 // pred_region
      _
    $region29: #{_forward.1} parent=1 // pred_fallthru
      _
    // Predicated region
    $region30: #{_forward.1} parent=1 // pred_check
      _
    $region31: #{_forward.1} parent=1 // pred_check_branch
      %55 = sbr.rel (0) target = $region33
    $region32: #{_forward.1} parent=1 // pred_region
      %57 = vsyncadd [#allocation6], 0
      %s59 = sshll.u32 %s7, 4
      %s60 = int_to_ptr.hbm [resolvable:$true] %s59
      %s61 = sshll.u32 [#allocation7], 4
      %s62 = int_to_ptr.vmem [resolvable:$true] %s61
      %64 = dma.hbm_to_vmem [thread:$0]  %s60, 128, %s62, [#allocation6]
    $region33: #{_forward.1} parent=1 // pred_fallthru
      _
    // Predicated region
    $region34: #{_forward.1} parent=1 // pred_check
      _
    $region35: #{_forward.1} parent=1 // pred_check_branch
      %66 = sbr.rel (0) target = $region37
    $region36: #{_forward.1} parent=1 // pred_region
      %68 = dma.done [#allocation3], 256
    $region37: #{_forward.1} parent=1 // pred_fallthru
      _
    // Predicated region
    $region38: #{_forward.1} parent=1 // pred_check
      _
    $region39: #{_forward.1} parent=1 // pred_check_branch
      %70 = sbr.rel (0) target = $region41
    $region40: #{_forward.1} parent=1 // pred_region
      %72 = dma.done [#allocation6], 16
    $region41: #{_forward.1} parent=1 // pred_fallthru
      _
    // Predicated region
    $region42: #{_forward.1} parent=1 // pred_check
      _
    $region43: #{_forward.1} parent=1 // pred_check_branch
      %74 = sbr.rel (0) target = $region45
    $region44: #{_forward.1} parent=1 // pred_region
      %76 = dma.done [#allocation6], 128
    $region45: #{_forward.1} parent=1 // pred_fallthru
      _
    %v77 = vld [vmem:[#allocation2] sm:$0xff]
    %v78 = vld [vmem:[#allocation2 + $0x8] sm:$0xff]
    %v79 = vld [vmem:[#allocation7] sm:$0x1]
    %v80 = vld [vmem:[#allocation7 + $0x1] sm:$0x1]
    %v81 = vld [vmem:[#allocation7 + $0x2] sm:$0x1]
    %v82 = vld [vmem:[#allocation7 + $0x3] sm:$0x1]
    %v83 = vld [vmem:[#allocation7 + $0x4] sm:$0x1]
    %v84 = vld [vmem:[#allocation7 + $0x5] sm:$0x1]
    %v85 = vld [vmem:[%s1] sm:$0xff]
    %v86 = vld [vmem:[%s1 + $0x8] sm:$0xff]
    %v87 = vld [vmem:[%s1 + $0x10] sm:$0xff]
    %v88 = vld [vmem:[%s1 + $0x18] sm:$0xff]
    %v89 = vld [vmem:[%s2] sm:$0x1]
    %v91 = vperm.slane %v89, 0
    %vm93 = vcmask 261120
    %v95 = vsel %vm93, %v77, 0
    %v98 = vsel %vm93, %v78, 0
    %100 = vmatpush.msra.mxu0 0.0
    %101 = vmatpush.msra.mxu0 0.0
    %102 = vmatpush.msra.mxu0 0.0
    %103 = vmatpush.msra.mxu0 0.0
    %104 = vmatpush.msra.mxu0 0.0
    %105 = vmatpush.msra.mxu0 0.0
    %106 = vmatpush.msra.mxu0 0.0
    %107 = vmatpush.msra.mxu0 0.0
    %108 = vmatpush.msra.mxu0 0.0
    %109 = vmatpush.msra.mxu0 0.0
    %110 = vmatpush.msra.mxu0 0.0
    %111 = vmatpush.msra.mxu0 0.0
    %112 = vmatpush.msra.mxu0 %v88
    %113 = vmatpush.msra.mxu0 %v87
    %114 = vmatpush.msra.mxu0 %v86
    %115 = vmatpush.msra.mxu0 %v85
    %116 = vmatmul.f32.gmra.mxu0 %v95
    %v117 = vpop.f32.mrf.mxu0
    %v118 = vadd.f32 %v91, %v117
    %119 = vmatmul.f32.gmra.mxu0 %v98
    %v120 = vpop.f32.mrf.mxu0
    %v121 = vadd.f32 %v91, %v120
    %122 = vdwg.mxu0
    %v123 = vmul.f32 %v118, 0.35355338
    %v124 = vmul.f32 %v121, 0.35355338
    %127 = vrot.lane.b32.xlu0 %v123, 120
    %v128 = vpop.permute.xlu0 %127
    %129 = vrot.lane.b32.xlu0 %v124, 120
    %v130 = vpop.permute.xlu0 %129
    %131 = vrot.lane.b32.xlu0 %v123, 112
    %v132 = vpop.permute.xlu0 %131
    %133 = vrot.lane.b32.xlu0 %v124, 112
    %v134 = vpop.permute.xlu0 %133
    %135 = vrot.lane.b32.xlu0 %v123, 104
    %v136 = vpop.permute.xlu0 %135
    %137 = vrot.lane.b32.xlu0 %v124, 104
    %v138 = vpop.permute.xlu0 %137
    %141 = vrot.lane.b32.xlu0 %v118, 120
    %v142 = vpop.permute.xlu0 %141
    %143 = vrot.lane.b32.xlu0 %v121, 120
    %v144 = vpop.permute.xlu0 %143
    %145 = vrot.lane.b32.xlu0 %v118, 112
    %v146 = vpop.permute.xlu0 %145
    %147 = vrot.lane.b32.xlu0 %v121, 112
    %v148 = vpop.permute.xlu0 %147
    %149 = vrot.lane.b32.xlu0 %v118, 104
    %v150 = vpop.permute.xlu0 %149
    %151 = vrot.lane.b32.xlu0 %v121, 104
    %v152 = vpop.permute.xlu0 %151
    %153 = vrot.lane.b32.xlu0 %v118, 96
    %v154 = vpop.permute.xlu0 %153
    %vm155 = vcmask 64512
    %v156 = vsel %vm155, %v123, 0
    %v158 = vsel %vm155, %v154, 0
    %160 = vmatpush.xpose.msra.mxu0 0.0
    %161 = vmatpush.xpose.msra.mxu0 0.0
    %162 = vmatpush.xpose.msra.mxu0 0.0
    %163 = vmatpush.xpose.msra.mxu0 0.0
    %164 = vmatpush.xpose.msra.mxu0 0.0
    %165 = vmatpush.xpose.msra.mxu0 0.0
    %166 = vmatpush.xpose.msra.mxu0 0.0
    %167 = vmatpush.xpose.msra.mxu0 0.0
    %168 = vmatpush.xpose.msra.mxu0 0.0
    %169 = vmatpush.xpose.msra.mxu0 0.0
    %170 = vmatpush.xpose.msra.mxu0 0.0
    %171 = vmatpush.xpose.msra.mxu0 0.0
    %172 = vmatpush.xpose.msra.mxu0 0.0
    %173 = vmatpush.xpose.msra.mxu0 0.0
    %174 = vmatpush.xpose.msra.mxu0 0.0
    %175 = vmatpush.xpose.msra.mxu0 %v158
    %176 = vmatmul.f32.gmra.mxu0 %v156
    %v177 = vpop.f32.mrf.mxu0
    %v178 = vadd.f32 0.0, %v177
    %179 = vdwg.mxu0
    %180 = vrot.lane.b32.xlu0 %v121, 96
    %v181 = vpop.permute.xlu0 %180
    %v182 = vsel %vm155, %v124, 0
    %v184 = vsel %vm155, %v181, 0
    %186 = vmatpush.xpose.msra.mxu0 0.0
    %187 = vmatpush.xpose.msra.mxu0 0.0
    %188 = vmatpush.xpose.msra.mxu0 0.0
    %189 = vmatpush.xpose.msra.mxu0 0.0
    %190 = vmatpush.xpose.msra.mxu0 0.0
    %191 = vmatpush.xpose.msra.mxu0 0.0
    %192 = vmatpush.xpose.msra.mxu0 0.0
    %193 = vmatpush.xpose.msra.mxu0 0.0
    %194 = vmatpush.xpose.msra.mxu0 0.0
    %195 = vmatpush.xpose.msra.mxu0 0.0
    %196 = vmatpush.xpose.msra.mxu0 0.0
    %197 = vmatpush.xpose.msra.mxu0 0.0
    %198 = vmatpush.xpose.msra.mxu0 0.0
    %199 = vmatpush.xpose.msra.mxu0 0.0
    %200 = vmatpush.xpose.msra.mxu0 0.0
    %201 = vmatpush.xpose.msra.mxu0 %v184
    %202 = vmatmul.f32.gmra.mxu0 %v182
    %v203 = vpop.f32.mrf.mxu0
    %v204 = vadd.f32 0.0, %v203
    %205 = vdwg.mxu0
    %206 = vrot.lane.b32.xlu0 %v142, 96
    %v207 = vpop.permute.xlu0 %206
    %v208 = vsel %vm155, %v128, 0
    %v210 = vsel %vm155, %v207, 0
    %212 = vmatpush.xpose.msra.mxu0 0.0
    %213 = vmatpush.xpose.msra.mxu0 0.0
    %214 = vmatpush.xpose.msra.mxu0 0.0
    %215 = vmatpush.xpose.msra.mxu0 0.0
    %216 = vmatpush.xpose.msra.mxu0 0.0
    %217 = vmatpush.xpose.msra.mxu0 0.0
    %218 = vmatpush.xpose.msra.mxu0 0.0
    %219 = vmatpush.xpose.msra.mxu0 0.0
    %220 = vmatpush.xpose.msra.mxu0 0.0
    %221 = vmatpush.xpose.msra.mxu0 0.0
    %222 = vmatpush.xpose.msra.mxu0 0.0
    %223 = vmatpush.xpose.msra.mxu0 0.0
    %224 = vmatpush.xpose.msra.mxu0 0.0
    %225 = vmatpush.xpose.msra.mxu0 0.0
    %226 = vmatpush.xpose.msra.mxu0 0.0
    %227 = vmatpush.xpose.msra.mxu0 %v210
    %228 = vmatmul.f32.gmra.mxu0 %v208
    %v229 = vpop.f32.mrf.mxu0
    %v230 = vadd.f32 0.0, %v229
    %231 = vdwg.mxu0
    %232 = vrot.lane.b32.xlu0 %v144, 96
    %v233 = vpop.permute.xlu0 %232
    %v234 = vsel %vm155, %v130, 0
    %v236 = vsel %vm155, %v233, 0
    %238 = vmatpush.xpose.msra.mxu0 0.0
    %239 = vmatpush.xpose.msra.mxu0 0.0
    %240 = vmatpush.xpose.msra.mxu0 0.0
    %241 = vmatpush.xpose.msra.mxu0 0.0
    %242 = vmatpush.xpose.msra.mxu0 0.0
    %243 = vmatpush.xpose.msra.mxu0 0.0
    %244 = vmatpush.xpose.msra.mxu0 0.0
    %245 = vmatpush.xpose.msra.mxu0 0.0
    %246 = vmatpush.xpose.msra.mxu0 0.0
    %247 = vmatpush.xpose.msra.mxu0 0.0
    %248 = vmatpush.xpose.msra.mxu0 0.0
    %249 = vmatpush.xpose.msra.mxu0 0.0
    %250 = vmatpush.xpose.msra.mxu0 0.0
    %251 = vmatpush.xpose.msra.mxu0 0.0
    %252 = vmatpush.xpose.msra.mxu0 0.0
    %253 = vmatpush.xpose.msra.mxu0 %v236
    %254 = vmatmul.f32.gmra.mxu0 %v234
    %v255 = vpop.f32.mrf.mxu0
    %v256 = vadd.f32 0.0, %v255
    %257 = vdwg.mxu0
    %258 = vrot.lane.b32.xlu0 %v146, 96
    %v259 = vpop.permute.xlu0 %258
    %v260 = vsel %vm155, %v132, 0
    %v262 = vsel %vm155, %v259, 0
    %264 = vmatpush.xpose.msra.mxu0 0.0
    %265 = vmatpush.xpose.msra.mxu0 0.0
    %266 = vmatpush.xpose.msra.mxu0 0.0
    %267 = vmatpush.xpose.msra.mxu0 0.0
    %268 = vmatpush.xpose.msra.mxu0 0.0
    %269 = vmatpush.xpose.msra.mxu0 0.0
    %270 = vmatpush.xpose.msra.mxu0 0.0
    %271 = vmatpush.xpose.msra.mxu0 0.0
    %272 = vmatpush.xpose.msra.mxu0 0.0
    %273 = vmatpush.xpose.msra.mxu0 0.0
    %274 = vmatpush.xpose.msra.mxu0 0.0
    %275 = vmatpush.xpose.msra.mxu0 0.0
    %276 = vmatpush.xpose.msra.mxu0 0.0
    %277 = vmatpush.xpose.msra.mxu0 0.0
    %278 = vmatpush.xpose.msra.mxu0 0.0
    %279 = vmatpush.xpose.msra.mxu0 %v262
    %280 = vmatmul.f32.gmra.mxu0 %v260
    %v281 = vpop.f32.mrf.mxu0
    %v282 = vadd.f32 0.0, %v281
    %283 = vdwg.mxu0
    %284 = vrot.lane.b32.xlu0 %v148, 96
    %v285 = vpop.permute.xlu0 %284
    %v286 = vsel %vm155, %v134, 0
    %v288 = vsel %vm155, %v285, 0
    %290 = vmatpush.xpose.msra.mxu0 0.0
    %291 = vmatpush.xpose.msra.mxu0 0.0
    %292 = vmatpush.xpose.msra.mxu0 0.0
    %293 = vmatpush.xpose.msra.mxu0 0.0
    %294 = vmatpush.xpose.msra.mxu0 0.0
    %295 = vmatpush.xpose.msra.mxu0 0.0
    %296 = vmatpush.xpose.msra.mxu0 0.0
    %297 = vmatpush.xpose.msra.mxu0 0.0
    %298 = vmatpush.xpose.msra.mxu0 0.0
    %299 = vmatpush.xpose.msra.mxu0 0.0
    %300 = vmatpush.xpose.msra.mxu0 0.0
    %301 = vmatpush.xpose.msra.mxu0 0.0
    %302 = vmatpush.xpose.msra.mxu0 0.0
    %303 = vmatpush.xpose.msra.mxu0 0.0
    %304 = vmatpush.xpose.msra.mxu0 0.0
    %305 = vmatpush.xpose.msra.mxu0 %v288
    %306 = vmatmul.f32.gmra.mxu0 %v286
    %v307 = vpop.f32.mrf.mxu0
    %v308 = vadd.f32 0.0, %v307
    %309 = vdwg.mxu0
    %310 = vrot.lane.b32.xlu0 %v150, 96
    %v311 = vpop.permute.xlu0 %310
    %v312 = vsel %vm155, %v136, 0
    %v314 = vsel %vm155, %v311, 0
    %316 = vmatpush.xpose.msra.mxu0 0.0
    %317 = vmatpush.xpose.msra.mxu0 0.0
    %318 = vmatpush.xpose.msra.mxu0 0.0
    %319 = vmatpush.xpose.msra.mxu0 0.0
    %320 = vmatpush.xpose.msra.mxu0 0.0
    %321 = vmatpush.xpose.msra.mxu0 0.0
    %322 = vmatpush.xpose.msra.mxu0 0.0
    %323 = vmatpush.xpose.msra.mxu0 0.0
    %324 = vmatpush.xpose.msra.mxu0 0.0
    %325 = vmatpush.xpose.msra.mxu0 0.0
    %326 = vmatpush.xpose.msra.mxu0 0.0
    %327 = vmatpush.xpose.msra.mxu0 0.0
    %328 = vmatpush.xpose.msra.mxu0 0.0
    %329 = vmatpush.xpose.msra.mxu0 0.0
    %330 = vmatpush.xpose.msra.mxu0 0.0
    %331 = vmatpush.xpose.msra.mxu0 %v314
    %332 = vmatmul.f32.gmra.mxu0 %v312
    %v333 = vpop.f32.mrf.mxu0
    %v334 = vadd.f32 0.0, %v333
    %335 = vdwg.mxu0
    %336 = vrot.lane.b32.xlu0 %v152, 96
    %v337 = vpop.permute.xlu0 %336
    %v338 = vsel %vm155, %v138, 0
    %v340 = vsel %vm155, %v337, 0
    %342 = vmatpush.xpose.msra.mxu0 0.0
    %343 = vmatpush.xpose.msra.mxu0 0.0
    %344 = vmatpush.xpose.msra.mxu0 0.0
    %345 = vmatpush.xpose.msra.mxu0 0.0
    %346 = vmatpush.xpose.msra.mxu0 0.0
    %347 = vmatpush.xpose.msra.mxu0 0.0
    %348 = vmatpush.xpose.msra.mxu0 0.0
    %349 = vmatpush.xpose.msra.mxu0 0.0
    %350 = vmatpush.xpose.msra.mxu0 0.0
    %351 = vmatpush.xpose.msra.mxu0 0.0
    %352 = vmatpush.xpose.msra.mxu0 0.0
    %353 = vmatpush.xpose.msra.mxu0 0.0
    %354 = vmatpush.xpose.msra.mxu0 0.0
    %355 = vmatpush.xpose.msra.mxu0 0.0
    %356 = vmatpush.xpose.msra.mxu0 0.0
    %357 = vmatpush.xpose.msra.mxu0 %v340
    %358 = vmatmul.f32.gmra.mxu0 %v338
    %v359 = vpop.f32.mrf.mxu0
    %v360 = vadd.f32 0.0, %v359
    %361 = vdwg.mxu0
    %v362 = vsel %vm155, %v178, -inf
    %363 = vmax.xlane.f32.xlu0 %v362
    %v364 = vpop.xlane.xlu0 %363
    %v365 = vsel %vm155, %v204, -inf
    %366 = vmax.xlane.f32.xlu0 %v365
    %v367 = vpop.xlane.xlu0 %366
    %v368 = vsel %vm155, %v230, -inf
    %369 = vmax.xlane.f32.xlu0 %v368
    %v370 = vpop.xlane.xlu0 %369
    %v371 = vsel %vm155, %v256, -inf
    %372 = vmax.xlane.f32.xlu0 %v371
    %v373 = vpop.xlane.xlu0 %372
    %v374 = vsel %vm155, %v282, -inf
    %375 = vmax.xlane.f32.xlu0 %v374
    %v376 = vpop.xlane.xlu0 %375
    %v377 = vsel %vm155, %v308, -inf
    %378 = vmax.xlane.f32.xlu0 %v377
    %v379 = vpop.xlane.xlu0 %378
    %v380 = vsel %vm155, %v334, -inf
    %381 = vmax.xlane.f32.xlu0 %v380
    %v382 = vpop.xlane.xlu0 %381
    %v383 = vsel %vm155, %v360, -inf
    %384 = vmax.xlane.f32.xlu0 %v383
    %v385 = vpop.xlane.xlu0 %384
    %v386 = vsub.f32 %v178, %v364
    %v387 = vsub.f32 %v204, %v367
    %v388 = vsub.f32 %v230, %v370
    %v389 = vsub.f32 %v256, %v373
    %v390 = vsub.f32 %v282, %v376
    %v391 = vsub.f32 %v308, %v379
    %v392 = vsub.f32 %v334, %v382
    %v393 = vsub.f32 %v360, %v385
    %v394 = vmul.f32 %v386, 1.442695
    %v395 = vpow.pop %v394
    %v396 = vmul.f32 %v387, 1.442695
    %v397 = vpow.pop %v396
    %v398 = vmul.f32 %v388, 1.442695
    %v399 = vpow.pop %v398
    %v400 = vmul.f32 %v389, 1.442695
    %v401 = vpow.pop %v400
    %v402 = vmul.f32 %v390, 1.442695
    %v403 = vpow.pop %v402
    %v404 = vmul.f32 %v391, 1.442695
    %v405 = vpow.pop %v404
    %v406 = vmul.f32 %v392, 1.442695
    %v407 = vpow.pop %v406
    %v408 = vmul.f32 %v393, 1.442695
    %v409 = vpow.pop %v408
    %v410 = vsel %vm155, %v395, 0.0
    %411 = vadd.xlane.f32.xlu0 %v410
    %v412 = vpop.xlane.xlu0 %411
    %v413 = vsel %vm155, %v397, 0.0
    %414 = vadd.xlane.f32.xlu0 %v413
    %v415 = vpop.xlane.xlu0 %414
    %v416 = vsel %vm155, %v399, 0.0
    %417 = vadd.xlane.f32.xlu0 %v416
    %v418 = vpop.xlane.xlu0 %417
    %v419 = vsel %vm155, %v401, 0.0
    %420 = vadd.xlane.f32.xlu0 %v419
    %v421 = vpop.xlane.xlu0 %420
    %v422 = vsel %vm155, %v403, 0.0
    %423 = vadd.xlane.f32.xlu0 %v422
    %v424 = vpop.xlane.xlu0 %423
    %v425 = vsel %vm155, %v405, 0.0
    %426 = vadd.xlane.f32.xlu0 %v425
    %v427 = vpop.xlane.xlu0 %426
    %v428 = vsel %vm155, %v407, 0.0
    %429 = vadd.xlane.f32.xlu0 %v428
    %v430 = vpop.xlane.xlu0 %429
    %v431 = vsel %vm155, %v409, 0.0
    %432 = vadd.xlane.f32.xlu0 %v431
    %v433 = vpop.xlane.xlu0 %432
    %v434 = vrcp.pop %v412
    %v435 = vmul.f32 %v412, %v434
    %v436 = vsub.f32 1.0, %v435
    %v437 = vmul.f32 %v434, %v436
    %v438 = vadd.f32 %v434, %v437
    %vm439 = vweird.f32 %v412
    %vm440 = vweird.f32 %v434
    %vm441 = vmor %vm439, %vm440
    %v442 = vsel %vm441, %v434, %v438
    %v443 = vand.u32 2147483647, %v412
    %vm444 = vcmp.eq.f32.partialorder %v443, 8.507059e+37
    %v445 = vand.u32 %v412, 2147483648
    %v446 = vor.u32 1.1754944e-38, %v445
    %v447 = vsel %vm444, %v446, %v442
    %v448 = vmul.f32 %v395, %v447
    %v449 = vrcp.pop %v415
    %v450 = vmul.f32 %v415, %v449
    %v451 = vsub.f32 1.0, %v450
    %v452 = vmul.f32 %v449, %v451
    %v453 = vadd.f32 %v449, %v452
    %vm454 = vweird.f32 %v415
    %vm455 = vweird.f32 %v449
    %vm456 = vmor %vm454, %vm455
    %v457 = vsel %vm456, %v449, %v453
    %v458 = vand.u32 2147483647, %v415
    %vm459 = vcmp.eq.f32.partialorder %v458, 8.507059e+37
    %v460 = vand.u32 %v415, 2147483648
    %v461 = vor.u32 1.1754944e-38, %v460
    %v462 = vsel %vm459, %v461, %v457
    %v463 = vmul.f32 %v397, %v462
    %v464 = vrcp.pop %v418
    %v465 = vmul.f32 %v418, %v464
    %v466 = vsub.f32 1.0, %v465
    %v467 = vmul.f32 %v464, %v466
    %v468 = vadd.f32 %v464, %v467
    %vm469 = vweird.f32 %v418
    %vm470 = vweird.f32 %v464
    %vm471 = vmor %vm469, %vm470
    %v472 = vsel %vm471, %v464, %v468
    %v473 = vand.u32 2147483647, %v418
    %vm474 = vcmp.eq.f32.partialorder %v473, 8.507059e+37
    %v475 = vand.u32 %v418, 2147483648
    %v476 = vor.u32 1.1754944e-38, %v475
    %v477 = vsel %vm474, %v476, %v472
    %v478 = vmul.f32 %v399, %v477
    %v479 = vrcp.pop %v421
    %v480 = vmul.f32 %v421, %v479
    %v481 = vsub.f32 1.0, %v480
    %v482 = vmul.f32 %v479, %v481
    %v483 = vadd.f32 %v479, %v482
    %vm484 = vweird.f32 %v421
    %vm485 = vweird.f32 %v479
    %vm486 = vmor %vm484, %vm485
    %v487 = vsel %vm486, %v479, %v483
    %v488 = vand.u32 2147483647, %v421
    %vm489 = vcmp.eq.f32.partialorder %v488, 8.507059e+37
    %v490 = vand.u32 %v421, 2147483648
    %v491 = vor.u32 1.1754944e-38, %v490
    %v492 = vsel %vm489, %v491, %v487
    %v493 = vmul.f32 %v401, %v492
    %v494 = vrcp.pop %v424
    %v495 = vmul.f32 %v424, %v494
    %v496 = vsub.f32 1.0, %v495
    %v497 = vmul.f32 %v494, %v496
    %v498 = vadd.f32 %v494, %v497
    %vm499 = vweird.f32 %v424
    %vm500 = vweird.f32 %v494
    %vm501 = vmor %vm499, %vm500
    %v502 = vsel %vm501, %v494, %v498
    %v503 = vand.u32 2147483647, %v424
    %vm504 = vcmp.eq.f32.partialorder %v503, 8.507059e+37
    %v505 = vand.u32 %v424, 2147483648
    %v506 = vor.u32 1.1754944e-38, %v505
    %v507 = vsel %vm504, %v506, %v502
    %v508 = vmul.f32 %v403, %v507
    %v509 = vrcp.pop %v427
    %v510 = vmul.f32 %v427, %v509
    %v511 = vsub.f32 1.0, %v510
    %v512 = vmul.f32 %v509, %v511
    %v513 = vadd.f32 %v509, %v512
    %vm514 = vweird.f32 %v427
    %vm515 = vweird.f32 %v509
    %vm516 = vmor %vm514, %vm515
    %v517 = vsel %vm516, %v509, %v513
    %v518 = vand.u32 2147483647, %v427
    %vm519 = vcmp.eq.f32.partialorder %v518, 8.507059e+37
    %v520 = vand.u32 %v427, 2147483648
    %v521 = vor.u32 1.1754944e-38, %v520
    %v522 = vsel %vm519, %v521, %v517
    %v523 = vmul.f32 %v405, %v522
    %v524 = vrcp.pop %v430
    %v525 = vmul.f32 %v430, %v524
    %v526 = vsub.f32 1.0, %v525
    %v527 = vmul.f32 %v524, %v526
    %v528 = vadd.f32 %v524, %v527
    %vm529 = vweird.f32 %v430
    %vm530 = vweird.f32 %v524
    %vm531 = vmor %vm529, %vm530
    %v532 = vsel %vm531, %v524, %v528
    %v533 = vand.u32 2147483647, %v430
    %vm534 = vcmp.eq.f32.partialorder %v533, 8.507059e+37
    %v535 = vand.u32 %v430, 2147483648
    %v536 = vor.u32 1.1754944e-38, %v535
    %v537 = vsel %vm534, %v536, %v532
    %v538 = vmul.f32 %v407, %v537
    %v539 = vrcp.pop %v433
    %v540 = vmul.f32 %v433, %v539
    %v541 = vsub.f32 1.0, %v540
    %v542 = vmul.f32 %v539, %v541
    %v543 = vadd.f32 %v539, %v542
    %vm544 = vweird.f32 %v433
    %vm545 = vweird.f32 %v539
    %vm546 = vmor %vm544, %vm545
    %v547 = vsel %vm546, %v539, %v543
    %v548 = vand.u32 2147483647, %v433
    %vm549 = vcmp.eq.f32.partialorder %v548, 8.507059e+37
    %v550 = vand.u32 %v433, 2147483648
    %v551 = vor.u32 1.1754944e-38, %v550
    %v552 = vsel %vm549, %v551, %v547
    %v553 = vmul.f32 %v409, %v552
    %554 = vst.msk [vmem:[#allocation11] sm:$0xff] %vm155, %v448
    %555 = vst.msk [vmem:[#allocation11 + $0x8] sm:$0xff] %vm155, %v478
    %556 = vst.msk [vmem:[#allocation11 + $0x10] sm:$0xff] %vm155, %v508
    %557 = vst.msk [vmem:[#allocation11 + $0x18] sm:$0xff] %vm155, %v538
    %s558 = scalar_lea.vmem [#allocation11], 32
    %559 = vst.msk [vmem:[%s558] sm:$0xff] %vm155, %v463
    %560 = vst.msk [vmem:[%s558 + $0x8] sm:$0xff] %vm155, %v493
    %561 = vst.msk [vmem:[%s558 + $0x10] sm:$0xff] %vm155, %v523
    %562 = vst.msk [vmem:[%s558 + $0x18] sm:$0xff] %vm155, %v553
    %563 = vrot.lane.b32.xlu0 %v118, 64
    %v564 = vpop.permute.xlu0 %563
    %v567 = vsel %vm155, %v448, 0
    %569 = vmatpush.msra.mxu0 0.0
    %570 = vmatpush.msra.mxu0 0.0
    %571 = vmatpush.msra.mxu0 0.0
    %572 = vmatpush.msra.mxu0 0.0
    %573 = vmatpush.msra.mxu0 0.0
    %574 = vmatpush.msra.mxu0 0.0
    %575 = vmatpush.msra.mxu0 0.0
    %576 = vmatpush.msra.mxu0 0.0
    %577 = vmatpush.msra.mxu0 0.0
    %578 = vmatpush.msra.mxu0 0.0
    %579 = vmatpush.msra.mxu0 0.0
    %580 = vmatpush.msra.mxu0 0.0
    %581 = vmatpush.msra.mxu0 0.0
    %582 = vmatpush.msra.mxu0 0.0
    %583 = vmatpush.msra.mxu0 0.0
    %584 = vmatpush.msra.mxu0 %v564
    %585 = vmatmul.f32.gmra.mxu0 %v567
    %v586 = vpop.f32.mrf.mxu0
    %v587 = vadd.f32 0.0, %v586
    %588 = vdwg.mxu0
    %589 = vrot.lane.b32.xlu0 %v121, 64
    %v590 = vpop.permute.xlu0 %589
    %v593 = vsel %vm155, %v463, 0
    %595 = vmatpush.msra.mxu0 0.0
    %596 = vmatpush.msra.mxu0 0.0
    %597 = vmatpush.msra.mxu0 0.0
    %598 = vmatpush.msra.mxu0 0.0
    %599 = vmatpush.msra.mxu0 0.0
    %600 = vmatpush.msra.mxu0 0.0
    %601 = vmatpush.msra.mxu0 0.0
    %602 = vmatpush.msra.mxu0 0.0
    %603 = vmatpush.msra.mxu0 0.0
    %604 = vmatpush.msra.mxu0 0.0
    %605 = vmatpush.msra.mxu0 0.0
    %606 = vmatpush.msra.mxu0 0.0
    %607 = vmatpush.msra.mxu0 0.0
    %608 = vmatpush.msra.mxu0 0.0
    %609 = vmatpush.msra.mxu0 0.0
    %610 = vmatpush.msra.mxu0 %v590
    %611 = vmatmul.f32.gmra.mxu0 %v593
    %v612 = vpop.f32.mrf.mxu0
    %v613 = vadd.f32 0.0, %v612
    %614 = vdwg.mxu0
    %615 = vrot.lane.b32.xlu0 %v142, 64
    %v616 = vpop.permute.xlu0 %615
    %v619 = vsel %vm155, %v478, 0
    %621 = vmatpush.msra.mxu0 0.0
    %622 = vmatpush.msra.mxu0 0.0
    %623 = vmatpush.msra.mxu0 0.0
    %624 = vmatpush.msra.mxu0 0.0
    %625 = vmatpush.msra.mxu0 0.0
    %626 = vmatpush.msra.mxu0 0.0
    %627 = vmatpush.msra.mxu0 0.0
    %628 = vmatpush.msra.mxu0 0.0
    %629 = vmatpush.msra.mxu0 0.0
    %630 = vmatpush.msra.mxu0 0.0
    %631 = vmatpush.msra.mxu0 0.0
    %632 = vmatpush.msra.mxu0 0.0
    %633 = vmatpush.msra.mxu0 0.0
    %634 = vmatpush.msra.mxu0 0.0
    %635 = vmatpush.msra.mxu0 0.0
    %636 = vmatpush.msra.mxu0 %v616
    %637 = vmatmul.f32.gmra.mxu0 %v619
    %v638 = vpop.f32.mrf.mxu0
    %v639 = vadd.f32 0.0, %v638
    %640 = vdwg.mxu0
    %641 = vrot.lane.b32.xlu0 %v144, 64
    %v642 = vpop.permute.xlu0 %641
    %v645 = vsel %vm155, %v493, 0
    %647 = vmatpush.msra.mxu0 0.0
    %648 = vmatpush.msra.mxu0 0.0
    %649 = vmatpush.msra.mxu0 0.0
    %650 = vmatpush.msra.mxu0 0.0
    %651 = vmatpush.msra.mxu0 0.0
    %652 = vmatpush.msra.mxu0 0.0
    %653 = vmatpush.msra.mxu0 0.0
    %654 = vmatpush.msra.mxu0 0.0
    %655 = vmatpush.msra.mxu0 0.0
    %656 = vmatpush.msra.mxu0 0.0
    %657 = vmatpush.msra.mxu0 0.0
    %658 = vmatpush.msra.mxu0 0.0
    %659 = vmatpush.msra.mxu0 0.0
    %660 = vmatpush.msra.mxu0 0.0
    %661 = vmatpush.msra.mxu0 0.0
    %662 = vmatpush.msra.mxu0 %v642
    %663 = vmatmul.f32.gmra.mxu0 %v645
    %v664 = vpop.f32.mrf.mxu0
    %v665 = vadd.f32 0.0, %v664
    %666 = vdwg.mxu0
    %667 = vrot.lane.b32.xlu0 %v146, 64
    %v668 = vpop.permute.xlu0 %667
    %v671 = vsel %vm155, %v508, 0
    %673 = vmatpush.msra.mxu0 0.0
    %674 = vmatpush.msra.mxu0 0.0
    %675 = vmatpush.msra.mxu0 0.0
    %676 = vmatpush.msra.mxu0 0.0
    %677 = vmatpush.msra.mxu0 0.0
    %678 = vmatpush.msra.mxu0 0.0
    %679 = vmatpush.msra.mxu0 0.0
    %680 = vmatpush.msra.mxu0 0.0
    %681 = vmatpush.msra.mxu0 0.0
    %682 = vmatpush.msra.mxu0 0.0
    %683 = vmatpush.msra.mxu0 0.0
    %684 = vmatpush.msra.mxu0 0.0
    %685 = vmatpush.msra.mxu0 0.0
    %686 = vmatpush.msra.mxu0 0.0
    %687 = vmatpush.msra.mxu0 0.0
    %688 = vmatpush.msra.mxu0 %v668
    %689 = vmatmul.f32.gmra.mxu0 %v671
    %v690 = vpop.f32.mrf.mxu0
    %v691 = vadd.f32 0.0, %v690
    %692 = vdwg.mxu0
    %693 = vrot.lane.b32.xlu0 %v148, 64
    %v694 = vpop.permute.xlu0 %693
    %v697 = vsel %vm155, %v523, 0
    %699 = vmatpush.msra.mxu0 0.0
    %700 = vmatpush.msra.mxu0 0.0
    %701 = vmatpush.msra.mxu0 0.0
    %702 = vmatpush.msra.mxu0 0.0
    %703 = vmatpush.msra.mxu0 0.0
    %704 = vmatpush.msra.mxu0 0.0
    %705 = vmatpush.msra.mxu0 0.0
    %706 = vmatpush.msra.mxu0 0.0
    %707 = vmatpush.msra.mxu0 0.0
    %708 = vmatpush.msra.mxu0 0.0
    %709 = vmatpush.msra.mxu0 0.0
    %710 = vmatpush.msra.mxu0 0.0
    %711 = vmatpush.msra.mxu0 0.0
    %712 = vmatpush.msra.mxu0 0.0
    %713 = vmatpush.msra.mxu0 0.0
    %714 = vmatpush.msra.mxu0 %v694
    %715 = vmatmul.f32.gmra.mxu0 %v697
    %v716 = vpop.f32.mrf.mxu0
    %v717 = vadd.f32 0.0, %v716
    %718 = vdwg.mxu0
    %719 = vrot.lane.b32.xlu0 %v150, 64
    %v720 = vpop.permute.xlu0 %719
    %v723 = vsel %vm155, %v538, 0
    %725 = vmatpush.msra.mxu0 0.0
    %726 = vmatpush.msra.mxu0 0.0
    %727 = vmatpush.msra.mxu0 0.0
    %728 = vmatpush.msra.mxu0 0.0
    %729 = vmatpush.msra.mxu0 0.0
    %730 = vmatpush.msra.mxu0 0.0
    %731 = vmatpush.msra.mxu0 0.0
    %732 = vmatpush.msra.mxu0 0.0
    %733 = vmatpush.msra.mxu0 0.0
    %734 = vmatpush.msra.mxu0 0.0
    %735 = vmatpush.msra.mxu0 0.0
    %736 = vmatpush.msra.mxu0 0.0
    %737 = vmatpush.msra.mxu0 0.0
    %738 = vmatpush.msra.mxu0 0.0
    %739 = vmatpush.msra.mxu0 0.0
    %740 = vmatpush.msra.mxu0 %v720
    %741 = vmatmul.f32.gmra.mxu0 %v723
    %v742 = vpop.f32.mrf.mxu0
    %v743 = vadd.f32 0.0, %v742
    %744 = vdwg.mxu0
    %745 = vrot.lane.b32.xlu0 %v152, 64
    %v746 = vpop.permute.xlu0 %745
    %v749 = vsel %vm155, %v553, 0
    %751 = vmatpush.msra.mxu0 0.0
    %752 = vmatpush.msra.mxu0 0.0
    %753 = vmatpush.msra.mxu0 0.0
    %754 = vmatpush.msra.mxu0 0.0
    %755 = vmatpush.msra.mxu0 0.0
    %756 = vmatpush.msra.mxu0 0.0
    %757 = vmatpush.msra.mxu0 0.0
    %758 = vmatpush.msra.mxu0 0.0
    %759 = vmatpush.msra.mxu0 0.0
    %760 = vmatpush.msra.mxu0 0.0
    %761 = vmatpush.msra.mxu0 0.0
    %762 = vmatpush.msra.mxu0 0.0
    %763 = vmatpush.msra.mxu0 0.0
    %764 = vmatpush.msra.mxu0 0.0
    %765 = vmatpush.msra.mxu0 0.0
    %766 = vmatpush.msra.mxu0 %v746
    %767 = vmatmul.f32.gmra.mxu0 %v749
    %v768 = vpop.f32.mrf.mxu0
    %v769 = vadd.f32 0.0, %v768
    %770 = vdwg.mxu0
    %773 = vrot.lane.b32.xlu0 %v639, 8
    %v774 = vpop.permute.xlu0 %773
    %775 = vrot.lane.b32.xlu0 %v665, 8
    %v776 = vpop.permute.xlu0 %775
    %781 = vrot.lane.b32.xlu0 %v691, 16
    %v782 = vpop.permute.xlu0 %781
    %783 = vrot.lane.b32.xlu0 %v717, 16
    %v784 = vpop.permute.xlu0 %783
    %789 = vrot.lane.b32.xlu0 %v743, 24
    %v790 = vpop.permute.xlu0 %789
    %791 = vrot.lane.b32.xlu0 %v769, 24
    %v792 = vpop.permute.xlu0 %791
    %v795 = vsel %vm155, %v587, %v774
    %v796 = vsel %vm155, %v613, %v776
    %vm797 = vcmask 130048
    %v798 = vsel %vm797, %v795, %v782
    %v799 = vsel %vm797, %v796, %v784
    %vm800 = vcmask 195584
    %v801 = vsel %vm800, %v798, %v790
    %v802 = vsel %vm800, %v799, %v792
    %v803 = vld [vmem:[%s3] sm:$0xff]
    %v804 = vld [vmem:[%s3 + $0x8] sm:$0xff]
    %v805 = vld [vmem:[%s3 + $0x10] sm:$0xff]
    %v806 = vld [vmem:[%s3 + $0x18] sm:$0xff]
    %v807 = vperm.slane %v79, 0
    %v809 = vsel %vm93, %v801, 0
    %v812 = vsel %vm93, %v802, 0
    %814 = vmatpush.msra.mxu0 0.0
    %815 = vmatpush.msra.mxu0 0.0
    %816 = vmatpush.msra.mxu0 0.0
    %817 = vmatpush.msra.mxu0 0.0
    %818 = vmatpush.msra.mxu0 0.0
    %819 = vmatpush.msra.mxu0 0.0
    %820 = vmatpush.msra.mxu0 0.0
    %821 = vmatpush.msra.mxu0 0.0
    %822 = vmatpush.msra.mxu0 0.0
    %823 = vmatpush.msra.mxu0 0.0
    %824 = vmatpush.msra.mxu0 0.0
    %825 = vmatpush.msra.mxu0 0.0
    %826 = vmatpush.msra.mxu0 %v806
    %827 = vmatpush.msra.mxu0 %v805
    %828 = vmatpush.msra.mxu0 %v804
    %829 = vmatpush.msra.mxu0 %v803
    %830 = vmatmul.f32.gmra.mxu0 %v809
    %v831 = vpop.f32.mrf.mxu0
    %v832 = vadd.f32 %v807, %v831
    %833 = vmatmul.f32.gmra.mxu0 %v812
    %v834 = vpop.f32.mrf.mxu0
    %v835 = vadd.f32 %v807, %v834
    %836 = vdwg.mxu0
    %v837 = vadd.f32 %v77, %v832
    %v838 = vadd.f32 %v78, %v835
    %v839 = vsel %vm93, %v837, 0.0
    %840 = vadd.xlane.f32.xlu0 %v839
    %v841 = vpop.xlane.xlu0 %840
    %v842 = vsel %vm93, %v838, 0.0
    %843 = vadd.xlane.f32.xlu0 %v842
    %v844 = vpop.xlane.xlu0 %843
    %v845 = vrcp.pop 32.0
    %v846 = vmul.f32 32.0, %v845
    %v847 = vsub.f32 1.0, %v846
    %v848 = vmul.f32 %v845, %v847
    %v849 = vadd.f32 %v845, %v848
    %vm850 = vweird.f32 %v845
    %v851 = vsel %vm850, %v845, %v849
    %v852 = vmul.f32 %v841, %v851
    %v853 = vmul.f32 %v844, %v851
    %v854 = vsub.f32 %v837, %v852
    %v855 = vsub.f32 %v838, %v853
    %v856 = vmul.f32 %v854, %v854
    %v857 = vmul.f32 %v855, %v855
    %v858 = vsel %vm93, %v856, 0.0
    %859 = vadd.xlane.f32.xlu0 %v858
    %v860 = vpop.xlane.xlu0 %859
    %v861 = vsel %vm93, %v857, 0.0
    %862 = vadd.xlane.f32.xlu0 %v861
    %v863 = vpop.xlane.xlu0 %862
    %v864 = vmul.f32 %v860, %v851
    %v865 = vmul.f32 %v863, %v851
    %v866 = vadd.f32 %v864, 1e-06
    %v867 = vadd.f32 %v865, 1e-06
    %v868 = vrsqrt.pop %v866
    %v869 = vmul.f32 %v868, %v866
    %v870 = vmul.f32 %v869, %v868
    %v871 = vmul.f32 0.5, %v870
    %v872 = vsub.f32 1.5, %v871
    %v873 = vmul.f32 %v868, %v872
    %vm874 = vweird.f32 %v866
    %vm875 = vweird.f32 %v868
    %vm876 = vmor %vm874, %vm875
    %v877 = vsel %vm876, %v868, %v873
    %v878 = vrsqrt.pop %v867
    %v879 = vmul.f32 %v878, %v867
    %v880 = vmul.f32 %v879, %v878
    %v881 = vmul.f32 0.5, %v880
    %v882 = vsub.f32 1.5, %v881
    %v883 = vmul.f32 %v878, %v882
    %vm884 = vweird.f32 %v867
    %vm885 = vweird.f32 %v878
    %vm886 = vmor %vm884, %vm885
    %v887 = vsel %vm886, %v878, %v883
    %v888 = vmul.f32 %v854, %v877
    %v889 = vmul.f32 %v855, %v887
    %v890 = vperm.slane %v80, 0
    %v891 = vmul.f32 %v888, %v890
    %v892 = vmul.f32 %v889, %v890
    %v893 = vperm.slane %v81, 0
    %v894 = vadd.f32 %v891, %v893
    %v895 = vadd.f32 %v892, %v893
    %896 = vst.msk [vmem:[#allocation9] sm:$0xff] %vm93, %v894
    %897 = vst.msk [vmem:[#allocation9 + $0x8] sm:$0xff] %vm93, %v895
    %v898 = vld [vmem:[%s4] sm:$0xff]
    %v899 = vld [vmem:[%s4 + $0x8] sm:$0xff]
    %v900 = vld [vmem:[%s4 + $0x10] sm:$0xff]
    %v901 = vld [vmem:[%s4 + $0x18] sm:$0xff]
    %v902 = vld [vmem:[#allocation5] sm:$0x1]
    %v904 = vperm.slane %v902, 0
    %v907 = vsel %vm93, %v894, 0
    %v910 = vsel %vm93, %v895, 0
    %912 = vmatpush.msra.mxu0 0.0
    %913 = vmatpush.msra.mxu0 0.0
    %914 = vmatpush.msra.mxu0 0.0
    %915 = vmatpush.msra.mxu0 0.0
    %916 = vmatpush.msra.mxu0 0.0
    %917 = vmatpush.msra.mxu0 0.0
    %918 = vmatpush.msra.mxu0 0.0
    %919 = vmatpush.msra.mxu0 0.0
    %920 = vmatpush.msra.mxu0 0.0
    %921 = vmatpush.msra.mxu0 0.0
    %922 = vmatpush.msra.mxu0 0.0
    %923 = vmatpush.msra.mxu0 0.0
    %924 = vmatpush.msra.mxu0 %v901
    %925 = vmatpush.msra.mxu0 %v900
    %926 = vmatpush.msra.mxu0 %v899
    %927 = vmatpush.msra.mxu0 %v898
    %928 = vmatmul.f32.gmra.mxu0 %v907
    %v929 = vpop.f32.mrf.mxu0
    %v930 = vadd.f32 %v904, %v929
    %931 = vmatmul.f32.gmra.mxu0 %v910
    %v932 = vpop.f32.mrf.mxu0
    %v933 = vadd.f32 %v904, %v932
    %934 = vdwg.mxu0
    %v935 = vmax.f32 %v930, 0.0
    %v936 = vmax.f32 %v933, 0.0
    %v937 = vld [vmem:[%s6] sm:$0xff]
    %v938 = vld [vmem:[%s6 + $0x8] sm:$0xff]
    %v939 = vld [vmem:[%s6 + $0x10] sm:$0xff]
    %v940 = vld [vmem:[%s6 + $0x18] sm:$0xff]
    %v941 = vld [vmem:[%s6 + $0x20] sm:$0xff]
    %v942 = vld [vmem:[%s6 + $0x28] sm:$0xff]
    %v943 = vld [vmem:[%s6 + $0x30] sm:$0xff]
    %v944 = vld [vmem:[%s6 + $0x38] sm:$0xff]
    %v945 = vperm.slane %v82, 0
    %vm946 = vcmask 523264
    %v948 = vsel %vm946, %v935, 0
    %v951 = vsel %vm946, %v936, 0
    %953 = vmatpush.msra.mxu0 0.0
    %954 = vmatpush.msra.mxu0 0.0
    %955 = vmatpush.msra.mxu0 0.0
    %956 = vmatpush.msra.mxu0 0.0
    %957 = vmatpush.msra.mxu0 0.0
    %958 = vmatpush.msra.mxu0 0.0
    %959 = vmatpush.msra.mxu0 0.0
    %960 = vmatpush.msra.mxu0 0.0
    %961 = vmatpush.msra.mxu0 %v944
    %962 = vmatpush.msra.mxu0 %v943
    %963 = vmatpush.msra.mxu0 %v942
    %964 = vmatpush.msra.mxu0 %v941
    %965 = vmatpush.msra.mxu0 %v940
    %966 = vmatpush.msra.mxu0 %v939
    %967 = vmatpush.msra.mxu0 %v938
    %968 = vmatpush.msra.mxu0 %v937
    %969 = vmatmul.f32.gmra.mxu0 %v948
    %v970 = vpop.f32.mrf.mxu0
    %v971 = vadd.f32 %v945, %v970
    %972 = vmatmul.f32.gmra.mxu0 %v951
    %v973 = vpop.f32.mrf.mxu0
    %v974 = vadd.f32 %v945, %v973
    %975 = vdwg.mxu0
    %v976 = vadd.f32 %v894, %v971
    %v977 = vadd.f32 %v895, %v974
    %v978 = vsel %vm93, %v976, 0.0
    %979 = vadd.xlane.f32.xlu0 %v978
    %v980 = vpop.xlane.xlu0 %979
    %v981 = vsel %vm93, %v977, 0.0
    %982 = vadd.xlane.f32.xlu0 %v981
    %v983 = vpop.xlane.xlu0 %982
    %v984 = vmul.f32 %v980, %v851
    %v985 = vmul.f32 %v983, %v851
    %v986 = vsub.f32 %v976, %v984
    %v987 = vsub.f32 %v977, %v985
    %v988 = vmul.f32 %v986, %v986
    %v989 = vmul.f32 %v987, %v987
    %v990 = vsel %vm93, %v988, 0.0
    %991 = vadd.xlane.f32.xlu0 %v990
    %v992 = vpop.xlane.xlu0 %991
    %v993 = vsel %vm93, %v989, 0.0
    %994 = vadd.xlane.f32.xlu0 %v993
    %v995 = vpop.xlane.xlu0 %994
    %v996 = vmul.f32 %v992, %v851
    %v997 = vmul.f32 %v995, %v851
    %v998 = vadd.f32 %v996, 1e-06
    %v999 = vadd.f32 %v997, 1e-06
    %v1000 = vrsqrt.pop %v998
    %v1001 = vmul.f32 %v1000, %v998
    %v1002 = vmul.f32 %v1001, %v1000
    %v1003 = vmul.f32 0.5, %v1002
    %v1004 = vsub.f32 1.5, %v1003
    %v1005 = vmul.f32 %v1000, %v1004
    %vm1006 = vweird.f32 %v998
    %vm1007 = vweird.f32 %v1000
    %vm1008 = vmor %vm1006, %vm1007
    %v1009 = vsel %vm1008, %v1000, %v1005
    %v1010 = vrsqrt.pop %v999
    %v1011 = vmul.f32 %v1010, %v999
    %v1012 = vmul.f32 %v1011, %v1010
    %v1013 = vmul.f32 0.5, %v1012
    %v1014 = vsub.f32 1.5, %v1013
    %v1015 = vmul.f32 %v1010, %v1014
    %vm1016 = vweird.f32 %v999
    %vm1017 = vweird.f32 %v1010
    %vm1018 = vmor %vm1016, %vm1017
    %v1019 = vsel %vm1018, %v1010, %v1015
    %v1020 = vmul.f32 %v986, %v1009
    %v1021 = vmul.f32 %v987, %v1019
    %v1022 = vperm.slane %v83, 0
    %v1023 = vmul.f32 %v1020, %v1022
    %v1024 = vmul.f32 %v1021, %v1022
    %v1025 = vperm.slane %v84, 0
    %v1026 = vadd.f32 %v1023, %v1025
    %v1027 = vadd.f32 %v1024, %v1025
    %1028 = vst.msk [vmem:[#allocation8] sm:$0xff] %vm93, %v1026
    %1029 = vst.msk [vmem:[#allocation8 + $0x8] sm:$0xff] %vm93, %v1027
    // Predicated region
    $region46: #{_forward.1} parent=1 // pred_check
      _
    $region47: #{_forward.1} parent=1 // pred_check_branch
      %1031 = sbr.rel (0) target = $region49
    $region48: #{_forward.1} parent=1 // pred_region
      %1033 = vsyncadd [#allocation4], 0
      %s1034 = sshll.u32 [#allocation8], 4
      %s1035 = int_to_ptr.vmem [resolvable:$true] %s1034
      %s1036 = sshll.u32 %s8, 4
      %s1037 = int_to_ptr.hbm [resolvable:$true] %s1036
      %1042 = dma.vmem_to_hbm [thread:$0]  %s1035, 256, %s1037, [#allocation4], 128, 128, 8
    $region49: #{_forward.1} parent=1 // pred_fallthru
      _
    // Predicated region
    $region50: #{_forward.1} parent=1 // pred_check
      _
    $region51: #{_forward.1} parent=1 // pred_check_branch
      %1044 = sbr.rel (0) target = $region53
    $region52: #{_forward.1} parent=1 // pred_region
      %1046 = vsyncadd [#allocation10], 0
      %s1047 = sshll.u32 [#allocation9], 4
      %s1048 = int_to_ptr.vmem [resolvable:$true] %s1047
      %s1049 = sshll.u32 %s9, 4
      %s1050 = int_to_ptr.hbm [resolvable:$true] %s1049
      %1055 = dma.vmem_to_hbm [thread:$0]  %s1048, 256, %s1050, [#allocation10], 128, 128, 8
    $region53: #{_forward.1} parent=1 // pred_fallthru
      _
    // Predicated region
    $region54: #{_forward.1} parent=1 // pred_check
      _
    $region55: #{_forward.1} parent=1 // pred_check_branch
      %1057 = sbr.rel (0) target = $region57
    $region56: #{_forward.1} parent=1 // pred_region
      %1059 = vsyncadd [#allocation10], 0
      %s1060 = sshll.u32 [#allocation11], 4
      %s1061 = int_to_ptr.vmem [resolvable:$true] %s1060
      %s1062 = sshll.u32 %s10, 4
      %s1063 = int_to_ptr.hbm [resolvable:$true] %s1062
      %1068 = dma.vmem_to_hbm [thread:$0]  %s1061, 1024, %s1063, [#allocation10], 128, 128, 8
    $region57: #{_forward.1} parent=1 // pred_fallthru
      _
    // Predicated region
    $region58: #{_forward.1} parent=1 // pred_check
      _
    $region59: #{_forward.1} parent=1 // pred_check_branch
      %1070 = sbr.rel (0) target = $region61
    $region60: #{_forward.1} parent=1 // pred_region
      %1072 = dma.done [#allocation4], 256
    $region61: #{_forward.1} parent=1 // pred_fallthru
      _
    // Predicated region
    $region62: #{_forward.1} parent=1 // pred_check
      _
    $region63: #{_forward.1} parent=1 // pred_check_branch
      %1074 = sbr.rel (0) target = $region65
    $region64: #{_forward.1} parent=1 // pred_region
      %1076 = dma.done [#allocation10], 256
    $region65: #{_forward.1} parent=1 // pred_fallthru
      _
    // Predicated region
    $region66: #{_forward.1} parent=1 // pred_check
      _
    $region67: #{_forward.1} parent=1 // pred_check_branch
      %1078 = sbr.rel (0) target = $region69
    $region68: #{_forward.1} parent=1 // pred_region
      %1080 = dma.done [#allocation10], 1024
    $region69: #{_forward.1} parent=1 // pred_fallthru
      _
    %1081 = vsyncpa [#allocation3], 1
    %1082 = vsyncpa [#allocation6], 1
    %1083 = vsyncpa [#allocation4], 1
    %1084 = vsyncpa [#allocation10], 1

</llo_original>
